<compile_context>
chip_gen: v5e
topology: v5e:2x2
jax: 0.10.0
libtpu: 0.0.40
codegen_flags: <defaults>
</compile_context>

<pallas_src>
import jax
import jax.numpy as jnp
from jax.experimental import pallas as pl
from jax.experimental.pallas import tpu as pltpu

BN_EPS = 1e-5


def _round_up(n, m):
    return (n + m - 1) // m * m


def mlp_kernel(x_ref, w1_ref, gb_ref, w2_ref, b2_ref, o_ref):
    mm_dtype = w1_ref.dtype  # matmul operand dtype (bf16 or f32), set by wrapper

    # ---- Linear 1: (B, In) @ (In, Hp), f32 accumulation. b1 omitted (no-op
    # under training-mode BatchNorm). ----
    h = jnp.dot(
        x_ref[...].astype(mm_dtype), w1_ref[...], preferred_element_type=jnp.float32
    )  # (B, Hp) f32

    # ---- BatchNorm1d: one-pass batch stats + single scale/shift pass ----
    inv_n = 1.0 / h.shape[0]
    s1 = jnp.sum(h, axis=0, keepdims=True)        # (1, Hp)
    s2 = jnp.sum(h * h, axis=0, keepdims=True)    # (1, Hp)
    mean = s1 * inv_n
    var = jnp.maximum(s2 * inv_n - mean * mean, 0.0)
    gamma = gb_ref[0:1, :]
    beta = gb_ref[1:2, :]
    scale = gamma * jax.lax.rsqrt(var + BN_EPS)   # (1, Hp)
    shift = beta - mean * scale                   # (1, Hp)

    # ---- fused BN-apply + ReLU: one elementwise pass over (B, Hp) ----
    h_relu = jnp.maximum(h * scale + shift, 0.0)

    # ---- Linear 2: (B, Hp) @ (Hp, Outp) + (1, Outp) ----
    o_ref[...] = (
        jnp.dot(h_relu.astype(mm_dtype), w2_ref[...], preferred_element_type=jnp.float32)
        + b2_ref[...]
    )


def mlp_forward(x, w1, b1, gamma, beta, w2, b2, *, matmul_dtype=jnp.bfloat16):
    """x: (B, In); w1: (H, In), w2: (Out, H) in PyTorch layout.

    b1 is accepted for API parity but not used: under training-mode BatchNorm
    the bias of the preceding Linear is cancelled by the mean subtraction.
    """
    del b1
    B, in_size = x.shape
    H = w1.shape[0]
    out_size = w2.shape[0]
    Hp = _round_up(H, 128)
    Op = _round_up(out_size, 128)

    # Glue: pre-transpose + zero-pad weights to lane-dense widths, cast matmul
    # operands, pack small per-feature vectors.
    w1_t = jnp.zeros((in_size, Hp), matmul_dtype).at[:, :H].set(w1.T.astype(matmul_dtype))
    w2_t = (
        jnp.zeros((Hp, Op), matmul_dtype)
        .at[:H, :out_size]
        .set(w2.T.astype(matmul_dtype))
    )
    # gamma padded with 0 so padded hidden columns stay exactly 0 through BN.
    gb = (
        jnp.zeros((2, Hp), jnp.float32)
        .at[0, :H].set(gamma.astype(jnp.float32))
        .at[1, :H].set(beta.astype(jnp.float32))
    )
    b2_r = jnp.zeros((1, Op), jnp.float32).at[0, :out_size].set(b2.astype(jnp.float32))

    itemsize = jnp.dtype(matmul_dtype).itemsize
    cost = pl.CostEstimate(
        flops=2 * B * in_size * Hp + 2 * B * Hp * Op + 8 * B * Hp,
        transcendentals=Hp,
        bytes_accessed=(
            x.size * 4
            + (w1_t.size + w2_t.size) * itemsize
            + (gb.size + b2_r.size) * 4
            + B * Op * 4
        ),
    )

    vmem = pl.BlockSpec(memory_space=pltpu.MemorySpace.VMEM)
    out_p = pl.pallas_call(
        mlp_kernel,
        out_shape=jax.ShapeDtypeStruct((B, Op), jnp.float32),
        in_specs=[vmem] * 5,
        out_specs=vmem,
        compiler_params=pltpu.CompilerParams(vmem_limit_bytes=64 * 1024 * 1024),
        cost_estimate=cost,
    )(x, w1_t, gb, w2_t, b2_r)

    # Slice the lane-dense padded output back to the logical width.
    return out_p[:, :out_size]


def mlp_reference(x, w1, b1, gamma, beta, w2, b2):
    h = x @ w1.T + b1
    mean = jnp.mean(h, axis=0, keepdims=True)
    var = jnp.mean((h - mean) ** 2, axis=0, keepdims=True)
    h = (h - mean) / jnp.sqrt(var + BN_EPS)
    h = h * gamma + beta
    h = jnp.maximum(h, 0.0)
    return h @ w2.T + b2


if __name__ == "__main__":
    # Small shapes consistent with the module: MLP(input_size=32, hidden_size=64,
    # output_size=16, depth=2), batch=8.
    batch, input_size, hidden_size, output_size = 8, 32, 64, 16

    key = jax.random.PRNGKey(0)
    k_x, k_w1, k_b1, k_w2, k_b2 = jax.random.split(key, 5)

    x = jax.random.normal(k_x, (batch, input_size), dtype=jnp.float32)

    # Deterministic PyTorch-style init: U(-1/sqrt(fan_in), 1/sqrt(fan_in)).
    bound1 = 1.0 / (input_size ** 0.5)
    w1 = jax.random.uniform(k_w1, (hidden_size, input_size), jnp.float32, -bound1, bound1)
    b1 = jax.random.uniform(k_b1, (hidden_size,), jnp.float32, -bound1, bound1)

    bound2 = 1.0 / (hidden_size ** 0.5)
    w2 = jax.random.uniform(k_w2, (output_size, hidden_size), jnp.float32, -bound2, bound2)
    b2 = jax.random.uniform(k_b2, (output_size,), jnp.float32, -bound2, bound2)

    # BatchNorm1d default affine init: gamma=1, beta=0.
    gamma = jnp.ones((hidden_size,), jnp.float32)
    beta = jnp.zeros((hidden_size,), jnp.float32)

    ref = mlp_reference(x, w1, b1, gamma, beta, w2, b2)

    # 1) f32 matmul path: tight check against the f32 reference.
    out_f32 = jax.block_until_ready(
        mlp_forward(x, w1, b1, gamma, beta, w2, b2, matmul_dtype=jnp.float32)
    )
    assert out_f32.shape == (batch, output_size)
    assert jnp.allclose(out_f32, ref, atol=1e-4, rtol=1e-4), "f32 mismatch vs reference"

    # 2) bf16 matmul path (default, the v6e/v7x fast path): looser tolerance.
    out_bf16 = jax.block_until_ready(
        mlp_forward(x, w1, b1, gamma, beta, w2, b2, matmul_dtype=jnp.bfloat16)
    )
    assert out_bf16.shape == (batch, output_size)
    assert jnp.allclose(out_bf16, ref, atol=5e-2, rtol=5e-2), "bf16 mismatch vs reference"

    print("KERNEL_OK")
</pallas_src>

<mosaic_0001>
module attributes {stable_mosaic.version = 11 : i64} {
  func.func @mlp_kernel(%arg0: memref<8x32xf32, #tpu.memory_space<vmem>>, %arg1: memref<32x128xf32, #tpu.memory_space<vmem>>, %arg2: memref<2x128xf32, #tpu.memory_space<vmem>>, %arg3: memref<128x128xf32, #tpu.memory_space<vmem>>, %arg4: memref<1x128xf32, #tpu.memory_space<vmem>>, %arg5: memref<8x128xf32, #tpu.memory_space<vmem>>) attributes {dimension_semantics = [], scalar_prefetch = 0 : i64, scratch_operands = 0 : i64, tpu.core_type = #tpu.core_type<tc>} {
    %c0 = arith.constant 0 : index
    %c0_0 = arith.constant 0 : index
    %0 = vector.load %arg0[%c0, %c0_0] : memref<8x32xf32, #tpu.memory_space<vmem>>, vector<8x32xf32>
    %c0_1 = arith.constant 0 : index
    %c0_2 = arith.constant 0 : index
    %1 = vector.load %arg1[%c0_1, %c0_2] : memref<32x128xf32, #tpu.memory_space<vmem>>, vector<32x128xf32>
    %cst = arith.constant dense<0.000000e+00> : vector<8x128xf32>
    %2 = tpu.matmul %0, %1, %cst {dimension_numbers = #tpu.dot_dimension_numbers<[1], [0], [0], [1], [0, 0, 1, 1], [], []>} : vector<8x32xf32>, vector<32x128xf32>, vector<8x128xf32> -> vector<8x128xf32>
    %cst_3 = arith.constant dense<0.000000e+00> : vector<128xf32>
    %3 = vector.multi_reduction <add>, %2, %cst_3 [0] : vector<8x128xf32> to vector<128xf32>
    %4 = vector.shape_cast %3 : vector<128xf32> to vector<1x128xf32>
    %5 = arith.mulf %2, %2 : vector<8x128xf32>
    %cst_4 = arith.constant dense<0.000000e+00> : vector<128xf32>
    %6 = vector.multi_reduction <add>, %5, %cst_4 [0] : vector<8x128xf32> to vector<128xf32>
    %7 = vector.shape_cast %6 : vector<128xf32> to vector<1x128xf32>
    %cst_5 = arith.constant 1.250000e-01 : f32
    %8 = vector.broadcast %cst_5 : f32 to vector<1x128xf32>
    %9 = arith.mulf %4, %8 : vector<1x128xf32>
    %cst_6 = arith.constant 1.250000e-01 : f32
    %10 = vector.broadcast %cst_6 : f32 to vector<1x128xf32>
    %11 = arith.mulf %7, %10 : vector<1x128xf32>
    %12 = arith.mulf %9, %9 : vector<1x128xf32>
    %13 = arith.subf %11, %12 : vector<1x128xf32>
    %cst_7 = arith.constant 0.000000e+00 : f32
    %14 = vector.broadcast %cst_7 : f32 to vector<1x128xf32>
    %15 = arith.maximumf %13, %14 : vector<1x128xf32>
    %c0_8 = arith.constant 0 : index
    %c0_9 = arith.constant 0 : index
    %16 = vector.load %arg2[%c0_8, %c0_9] : memref<2x128xf32, #tpu.memory_space<vmem>>, vector<1x128xf32>
    %c1 = arith.constant 1 : index
    %c0_10 = arith.constant 0 : index
    %17 = vector.load %arg2[%c1, %c0_10] : memref<2x128xf32, #tpu.memory_space<vmem>>, vector<1x128xf32>
    %cst_11 = arith.constant 9.99999974E-6 : f32
    %18 = vector.broadcast %cst_11 : f32 to vector<1x128xf32>
    %19 = arith.addf %15, %18 : vector<1x128xf32>
    %20 = math.rsqrt %19 : vector<1x128xf32>
    %21 = arith.mulf %16, %20 : vector<1x128xf32>
    %22 = arith.mulf %9, %21 : vector<1x128xf32>
    %23 = arith.subf %17, %22 : vector<1x128xf32>
    %24 = vector.broadcast %21 : vector<1x128xf32> to vector<8x128xf32>
    %25 = arith.mulf %2, %24 : vector<8x128xf32>
    %26 = vector.broadcast %23 : vector<1x128xf32> to vector<8x128xf32>
    %27 = arith.addf %25, %26 : vector<8x128xf32>
    %cst_12 = arith.constant 0.000000e+00 : f32
    %28 = vector.broadcast %cst_12 : f32 to vector<8x128xf32>
    %29 = arith.maximumf %27, %28 : vector<8x128xf32>
    %c0_13 = arith.constant 0 : index
    %c0_14 = arith.constant 0 : index
    %30 = vector.load %arg3[%c0_13, %c0_14] : memref<128x128xf32, #tpu.memory_space<vmem>>, vector<128x128xf32>
    %cst_15 = arith.constant dense<0.000000e+00> : vector<8x128xf32>
    %31 = tpu.matmul %29, %30, %cst_15 {dimension_numbers = #tpu.dot_dimension_numbers<[1], [0], [0], [1], [0, 0, 1, 1], [], []>} : vector<8x128xf32>, vector<128x128xf32>, vector<8x128xf32> -> vector<8x128xf32>
    %c0_16 = arith.constant 0 : index
    %c0_17 = arith.constant 0 : index
    %32 = vector.load %arg4[%c0_16, %c0_17] : memref<1x128xf32, #tpu.memory_space<vmem>>, vector<1x128xf32>
    %33 = vector.broadcast %32 : vector<1x128xf32> to vector<8x128xf32>
    %34 = arith.addf %31, %33 : vector<8x128xf32>
    %c0_18 = arith.constant 0 : index
    %c0_19 = arith.constant 0 : index
    %35 = vector.load %arg5[%c0_18, %c0_19] : memref<8x128xf32, #tpu.memory_space<vmem>>, vector<8x128xf32>
    tpu.vector_store %arg5[%c0_18, %c0_19], %34 {strides = array<i32>} : memref<8x128xf32, #tpu.memory_space<vmem>>, vector<8x128xf32>,
    return
  }
}

</mosaic_0001>

<llo_original>
// kernel: tpu_custom_call.1
$region0: #{tpu_custom_call.1}
  #allocation0 [shape = 'u32[]', space=smem, size = 0x4, offset = 0x4, fixed_abs, tag = 'smem constant byte address 0x4 - core index']
  #allocation1 [shape = 'u32[72,128]{1,0:T(1,128)}', space=vmem, size = 0x9000, scoped, tag = 'internal scratch']
  %s0 = inlined_call_operand.hbm [shape: f32[8,32], index: 0, kind: input, shape index: {}]
  %s1 = inlined_call_operand.hbm [shape: f32[32,128], index: 1, kind: input, shape index: {}]
  %s2 = inlined_call_operand.hbm [shape: f32[2,128], index: 2, kind: input, shape index: {}]
  %s3 = inlined_call_operand.hbm [shape: f32[128,128], index: 3, kind: input, shape index: {}]
  %s4 = inlined_call_operand.vmem [shape: f32[1,128], index: 4, kind: input, shape index: {}]
  %s5 = inlined_call_operand.hbm [shape: f32[8,128], index: 5, kind: output, shape index: {}]
  %s6 = sld [smem:[#allocation0]]
  $region46: #{tpu_custom_call.1} parent=0
    _
  %s8 = ssub.s32 1, %s6
  %s9 = scalar_select 0, %s8, %s6
  $region1: #{tpu_custom_call.1} parent=0
    #allocation2 [shape = 'u8[4096]{0}', space=vmem, size = 0x1000, scoped, tag = 'input window, operand 0, single buffered']
    #allocation3 [shape = 's32[1]{0}', space=sflag, size = 0x4, scoped, tag = 'scoped memory for tpu_custom_call.1']
    #allocation4 [shape = 's32[1]{0}', space=sflag, size = 0x4, scoped, tag = 'scoped memory for tpu_custom_call.1']
    #allocation5 [shape = 'u8[16384]{0}', space=vmem, size = 0x4000, scoped, tag = 'input window, operand 1, single buffered']
    #allocation6 [shape = 's32[1]{0}', space=sflag, size = 0x4, scoped, tag = 'scoped memory for tpu_custom_call.1']
    #allocation7 [shape = 'u8[1024]{0}', space=vmem, size = 0x400, scoped, tag = 'input window, operand 2, single buffered']
    #allocation8 [shape = 'u8[65536]{0}', space=vmem, size = 0x10000, scoped, tag = 'input window, operand 3, single buffered']
    #allocation9 [shape = 's32[1]{0}', space=sflag, size = 0x4, scoped, tag = 'scoped memory for tpu_custom_call.1']
    #allocation10 [shape = 'u8[4096]{0}', space=vmem, size = 0x1000, scoped, tag = 'output window, operand 0, single buffered']
    %10 = vsyncpa [#allocation3], 0
    %11 = vsyncpa [#allocation6], 0
    %12 = vsyncpa [#allocation9], 0
    %13 = vsyncpa [#allocation4], 0
    // Predicated region
    $region2: #{tpu_custom_call.1} parent=1 // pred_check
      _
    $region3: #{tpu_custom_call.1} parent=1 // pred_check_branch
      %15 = sbr.rel (0) target = $region5
    $region4: #{tpu_custom_call.1} parent=1 // pred_region
      %17 = vsyncadd [#allocation3], 0
      %s19 = sshll.u32 %s0, 4
      %s20 = int_to_ptr.hbm [resolvable:$true] %s19
      %s21 = sshll.u32 [#allocation2], 4
      %s22 = int_to_ptr.vmem [resolvable:$true] %s21
      %24 = dma.hbm_to_vmem [thread:$0]  %s20, 128, %s22, [#allocation3]
    $region5: #{tpu_custom_call.1} parent=1 // pred_fallthru
      _
    // Predicated region
    $region6: #{tpu_custom_call.1} parent=1 // pred_check
      _
    $region7: #{tpu_custom_call.1} parent=1 // pred_check_branch
      %26 = sbr.rel (0) target = $region9
    $region8: #{tpu_custom_call.1} parent=1 // pred_region
      %28 = vsyncadd [#allocation6], 0
      %s29 = sshll.u32 %s1, 4
      %s30 = int_to_ptr.hbm [resolvable:$true] %s29
      %s31 = sshll.u32 [#allocation5], 4
      %s32 = int_to_ptr.vmem [resolvable:$true] %s31
      %37 = dma.hbm_to_vmem [thread:$0]  %s30, 512, %s32, [#allocation6], 128, 128, 8
    $region9: #{tpu_custom_call.1} parent=1 // pred_fallthru
      _
    // Predicated region
    $region10: #{tpu_custom_call.1} parent=1 // pred_check
      _
    $region11: #{tpu_custom_call.1} parent=1 // pred_check_branch
      %39 = sbr.rel (0) target = $region13
    $region12: #{tpu_custom_call.1} parent=1 // pred_region
      %41 = vsyncadd [#allocation6], 0
      %s43 = sshll.u32 %s2, 4
      %s44 = int_to_ptr.hbm [resolvable:$true] %s43
      %s45 = sshll.u32 [#allocation7], 4
      %s46 = int_to_ptr.vmem [resolvable:$true] %s45
      %48 = dma.hbm_to_vmem [thread:$0]  %s44, 32, %s46, [#allocation6]
    $region13: #{tpu_custom_call.1} parent=1 // pred_fallthru
      _
    // Predicated region
    $region14: #{tpu_custom_call.1} parent=1 // pred_check
      _
    $region15: #{tpu_custom_call.1} parent=1 // pred_check_branch
      %50 = sbr.rel (0) target = $region17
    $region16: #{tpu_custom_call.1} parent=1 // pred_region
      %52 = vsyncadd [#allocation9], 0
      %s53 = sshll.u32 %s3, 4
      %s54 = int_to_ptr.hbm [resolvable:$true] %s53
      %s55 = sshll.u32 [#allocation8], 4
      %s56 = int_to_ptr.vmem [resolvable:$true] %s55
      %61 = dma.hbm_to_vmem [thread:$0]  %s54, 2048, %s56, [#allocation9], 128, 128, 8
    $region17: #{tpu_custom_call.1} parent=1 // pred_fallthru
      _
    // Predicated region
    $region18: #{tpu_custom_call.1} parent=1 // pred_check
      _
    $region19: #{tpu_custom_call.1} parent=1 // pred_check_branch
      %63 = sbr.rel (0) target = $region21
    $region20: #{tpu_custom_call.1} parent=1 // pred_region
      _
    $region21: #{tpu_custom_call.1} parent=1 // pred_fallthru
      _
    // Predicated region
    $region22: #{tpu_custom_call.1} parent=1 // pred_check
      _
    $region23: #{tpu_custom_call.1} parent=1 // pred_check_branch
      %65 = sbr.rel (0) target = $region25
    $region24: #{tpu_custom_call.1} parent=1 // pred_region
      %67 = dma.done [#allocation3], 128
    $region25: #{tpu_custom_call.1} parent=1 // pred_fallthru
      _
    // Predicated region
    $region26: #{tpu_custom_call.1} parent=1 // pred_check
      _
    $region27: #{tpu_custom_call.1} parent=1 // pred_check_branch
      %69 = sbr.rel (0) target = $region29
    $region28: #{tpu_custom_call.1} parent=1 // pred_region
      %71 = dma.done [#allocation6], 512
    $region29: #{tpu_custom_call.1} parent=1 // pred_fallthru
      _
    // Predicated region
    $region30: #{tpu_custom_call.1} parent=1 // pred_check
      _
    $region31: #{tpu_custom_call.1} parent=1 // pred_check_branch
      %73 = sbr.rel (0) target = $region33
    $region32: #{tpu_custom_call.1} parent=1 // pred_region
      %75 = dma.done [#allocation6], 32
    $region33: #{tpu_custom_call.1} parent=1 // pred_fallthru
      _
    // Predicated region
    $region34: #{tpu_custom_call.1} parent=1 // pred_check
      _
    $region35: #{tpu_custom_call.1} parent=1 // pred_check_branch
      %77 = sbr.rel (0) target = $region37
    $region36: #{tpu_custom_call.1} parent=1 // pred_region
      %79 = dma.done [#allocation9], 2048
    $region37: #{tpu_custom_call.1} parent=1 // pred_fallthru
      _
    %v80 = vld [vmem:[#allocation2] sm:$0xff]
    %v81 = vld [vmem:[#allocation5] sm:$0xff]
    %v82 = vld [vmem:[#allocation5 + $0x8] sm:$0xff]
    %v83 = vld [vmem:[#allocation5 + $0x10] sm:$0xff]
    %v84 = vld [vmem:[#allocation5 + $0x18] sm:$0xff]
    %vm85 = vcmask 261120
    %v87 = vsel %vm85, %v80, 0
    %89 = vmatpush.msra.mxu0 0.0
    %90 = vmatpush.msra.mxu0 0.0
    %91 = vmatpush.msra.mxu0 0.0
    %92 = vmatpush.msra.mxu0 0.0
    %93 = vmatpush.msra.mxu0 0.0
    %94 = vmatpush.msra.mxu0 0.0
    %95 = vmatpush.msra.mxu0 0.0
    %96 = vmatpush.msra.mxu0 0.0
    %97 = vmatpush.msra.mxu0 0.0
    %98 = vmatpush.msra.mxu0 0.0
    %99 = vmatpush.msra.mxu0 0.0
    %100 = vmatpush.msra.mxu0 0.0
    %101 = vmatpush.msra.mxu0 %v84
    %102 = vmatpush.msra.mxu0 %v83
    %103 = vmatpush.msra.mxu0 %v82
    %104 = vmatpush.msra.mxu0 %v81
    %105 = vmatmul.f32.gmra.mxu0 %v87
    %v106 = vpop.f32.mrf.mxu0
    %v107 = vadd.f32 0.0, %v106
    %108 = vdwg.mxu0
    %v109 = vrot.slane %v107, 4
    %v110 = vadd.f32 %v107, %v109
    %v111 = vrot.slane %v110, 2
    %v112 = vadd.f32 %v110, %v111
    %v113 = vrot.slane %v112, 1
    %v114 = vadd.f32 %v112, %v113
    %v115 = vmul.f32 %v107, %v107
    %v116 = vrot.slane %v115, 4
    %v117 = vadd.f32 %v115, %v116
    %v118 = vrot.slane %v117, 2
    %v119 = vadd.f32 %v117, %v118
    %v120 = vrot.slane %v119, 1
    %v121 = vadd.f32 %v119, %v120
    %v122 = vmul.f32 %v114, 0.125
    %v123 = vmul.f32 %v121, 0.125
    %v124 = vmul.f32 %v122, %v122
    %v125 = vsub.f32 %v123, %v124
    %v126 = vmax.f32 %v125, 0.0
    %v127 = vld [vmem:[#allocation7] sm:$0x1]
    %v128 = vld [vmem:[#allocation7 + $0x1] sm:$0x1]
    %v129 = vadd.f32 %v126, 1e-05
    %v130 = vrsqrt.pop %v129
    %v131 = vmul.f32 %v130, %v129
    %v132 = vmul.f32 %v131, %v130
    %v133 = vmul.f32 0.5, %v132
    %v134 = vsub.f32 1.5, %v133
    %v135 = vmul.f32 %v130, %v134
    %vm136 = vweird.f32 %v129
    %vm137 = vweird.f32 %v130
    %vm138 = vmor %vm136, %vm137
    %v139 = vsel %vm138, %v130, %v135
    %v140 = vmul.f32 %v127, %v139
    %v141 = vmul.f32 %v122, %v140
    %v142 = vsub.f32 %v128, %v141
    %v143 = vperm.slane %v140, 0
    %v144 = vmul.f32 %v107, %v143
    %v145 = vperm.slane %v142, 0
    %v146 = vadd.f32 %v144, %v145
    %v147 = vmax.f32 %v146, 0.0
    %v148 = vld [vmem:[#allocation8] sm:$0xff]
    %v149 = vld [vmem:[#allocation8 + $0x8] sm:$0xff]
    %v150 = vld [vmem:[#allocation8 + $0x10] sm:$0xff]
    %v151 = vld [vmem:[#allocation8 + $0x18] sm:$0xff]
    %v152 = vld [vmem:[#allocation8 + $0x20] sm:$0xff]
    %v153 = vld [vmem:[#allocation8 + $0x28] sm:$0xff]
    %v154 = vld [vmem:[#allocation8 + $0x30] sm:$0xff]
    %v155 = vld [vmem:[#allocation8 + $0x38] sm:$0xff]
    %v156 = vld [vmem:[#allocation8 + $0x40] sm:$0xff]
    %v157 = vld [vmem:[#allocation8 + $0x48] sm:$0xff]
    %v158 = vld [vmem:[#allocation8 + $0x50] sm:$0xff]
    %v159 = vld [vmem:[#allocation8 + $0x58] sm:$0xff]
    %v160 = vld [vmem:[#allocation8 + $0x60] sm:$0xff]
    %v161 = vld [vmem:[#allocation8 + $0x68] sm:$0xff]
    %v162 = vld [vmem:[#allocation8 + $0x70] sm:$0xff]
    %v163 = vld [vmem:[#allocation8 + $0x78] sm:$0xff]
    %v164 = vld [vmem:[%s4] sm:$0x1]
    %v166 = vperm.slane %v164, 0
    %168 = vmatpush.msra.mxu0 %v163
    %169 = vmatpush.msra.mxu0 %v162
    %170 = vmatpush.msra.mxu0 %v161
    %171 = vmatpush.msra.mxu0 %v160
    %172 = vmatpush.msra.mxu0 %v159
    %173 = vmatpush.msra.mxu0 %v158
    %174 = vmatpush.msra.mxu0 %v157
    %175 = vmatpush.msra.mxu0 %v156
    %176 = vmatpush.msra.mxu0 %v155
    %177 = vmatpush.msra.mxu0 %v154
    %178 = vmatpush.msra.mxu0 %v153
    %179 = vmatpush.msra.mxu0 %v152
    %180 = vmatpush.msra.mxu0 %v151
    %181 = vmatpush.msra.mxu0 %v150
    %182 = vmatpush.msra.mxu0 %v149
    %183 = vmatpush.msra.mxu0 %v148
    %184 = vmatmul.f32.gmra.mxu0 %v147
    %v185 = vpop.f32.mrf.mxu0
    %v186 = vadd.f32 %v166, %v185
    %187 = vdwg.mxu0
    %188 = vst [vmem:[#allocation10] sm:$0xff] %v186
    // Predicated region
    $region38: #{tpu_custom_call.1} parent=1 // pred_check
      _
    $region39: #{tpu_custom_call.1} parent=1 // pred_check_branch
      %190 = sbr.rel (0) target = $region41
    $region40: #{tpu_custom_call.1} parent=1 // pred_region
      %192 = vsyncadd [#allocation4], 0
      %s194 = sshll.u32 [#allocation10], 4
      %s195 = int_to_ptr.vmem [resolvable:$true] %s194
      %s196 = sshll.u32 %s5, 4
      %s197 = int_to_ptr.hbm [resolvable:$true] %s196
      %199 = dma.vmem_to_hbm [thread:$0]  %s195, 128, %s197, [#allocation4]
    $region41: #{tpu_custom_call.1} parent=1 // pred_fallthru
      _
    // Predicated region
    $region42: #{tpu_custom_call.1} parent=1 // pred_check
      _
    $region43: #{tpu_custom_call.1} parent=1 // pred_check_branch
      %201 = sbr.rel (0) target = $region45
    $region44: #{tpu_custom_call.1} parent=1 // pred_region
      %203 = dma.done [#allocation4], 128
    $region45: #{tpu_custom_call.1} parent=1 // pred_fallthru
      _
    %204 = vsyncpa [#allocation3], 1
    %205 = vsyncpa [#allocation6], 1
    %206 = vsyncpa [#allocation9], 1
    %207 = vsyncpa [#allocation4], 1

</llo_original>
